<compile_context>
chip_gen: v6e
topology: v6e:2x2x1
jax: 0.10.0
libtpu: 0.0.40
codegen_flags: <defaults>
</compile_context>

<pallas_src>
import functools

import jax
import jax.numpy as jnp
from jax.experimental import pallas as pl
from jax.experimental.pallas import tpu as pltpu


def mlp_kernel(zt_ref, w1t_ref, b1_ref, w2_ref, b2_ref, o_ref):
    # zt_ref : (4, TB)   latents, batch on the lane axis
    # w1t_ref: (16, 4)   layer-1 weight, (out, in)
    # b1_ref : (16, 1)   layer-1 bias (column)
    # w2_ref : (16, 1)   layer-2 weight (out = 1)
    # b2_ref : (1, 1)    layer-2 bias, SMEM scalar
    # o_ref  : (1, TB)   lane-dense output
    zt = zt_ref[...]
    w1t = w1t_ref[...]

    # Layer 1 on the VPU: K=4 unrolled broadcast multiply-accumulate,
    # bias folded into the first term.  h[j, b] = b1[j] + sum_k w1t[j,k]*zt[k,b]
    h = b1_ref[...] + w1t[:, 0:1] * zt[0:1, :]
    for k in range(1, 4):
        h = h + w1t[:, k:k + 1] * zt[k:k + 1, :]
    h = jnp.maximum(h, 0.0)                                  # (16, TB) ReLU

    # Layer 2: broadcast multiply on VPU, sublane reduce on XLU.
    o = jnp.sum(h * w2_ref[...], axis=0, keepdims=True)      # (1, TB)
    o_ref[...] = (o + b2_ref[0, 0]).astype(o_ref.dtype)


@functools.partial(jax.jit, static_argnames=("tb",))
def latent_predictor_x5(z, w1, b1, w2, b2, *, tb=2048):
    """z: (B, 4); w1: (4, 16); b1: (1, 16); w2: (16, 1); b2: (1, 1) -> (B, 1)."""
    B = z.shape[0]
    # Batch tile: multiple of 128 lanes, capped so tiny batches are not
    # over-padded; padded batch Bp is an exact multiple of the tile.
    tb = max(128, min(tb, pl.next_power_of_2(B)))
    n_tiles = pl.cdiv(B, tb)
    bp = n_tiles * tb

    # Wrapper-side layout plumbing (XLA handles it): batch -> lane axis,
    # zero-pad the ragged tail, weights to (out, in)/(out, 1) column layout.
    zt = jnp.pad(z.T.astype(jnp.float32), ((0, 0), (0, bp - B)))  # (4, Bp)
    w1t = w1.T.astype(jnp.float32)                 # (16, 4)
    b1c = b1.reshape(16, 1).astype(jnp.float32)    # (16, 1)
    w2c = w2.astype(jnp.float32)                   # (16, 1)
    b2c = b2.reshape(1, 1).astype(jnp.float32)     # (1, 1)

    cost = pl.CostEstimate(
        flops=2 * B * (4 * 16 + 16 * 1),
        transcendentals=0,
        bytes_accessed=bp * 4 * 4 + bp * 4 + (16 * 4 + 16 + 16 + 1) * 4,
    )

    out = pl.pallas_call(
        mlp_kernel,
        out_shape=jax.ShapeDtypeStruct((1, bp), jnp.float32),
        grid_spec=pltpu.PrefetchScalarGridSpec(
            num_scalar_prefetch=0,
            grid=(n_tiles,),
            in_specs=[
                pl.BlockSpec((4, tb), lambda i: (0, i)),              # z tiles
                pl.BlockSpec((16, 4), lambda i: (0, 0)),              # w1 resident
                pl.BlockSpec((16, 1), lambda i: (0, 0)),              # b1 resident
                pl.BlockSpec((16, 1), lambda i: (0, 0)),              # w2 resident
                pl.BlockSpec((1, 1), lambda i: (0, 0),
                             memory_space=pltpu.MemorySpace.SMEM),    # b2 scalar
            ],
            out_specs=pl.BlockSpec((1, tb), lambda i: (0, i)),
        ),
        compiler_params=pltpu.CompilerParams(
            dimension_semantics=("parallel",)),    # dual-TC split on v7x
        cost_estimate=cost,
    )(zt, w1t, b1c, w2c, b2c)

    return out[:, :B].T                            # back to (B, 1)


def init_params(key):
    # Deterministic init mirroring nn.Linear defaults: U(-1/sqrt(fan_in), 1/sqrt(fan_in)).
    k1, k2, k3, k4 = jax.random.split(key, 4)
    bound1 = 1.0 / jnp.sqrt(4.0)
    bound2 = 1.0 / jnp.sqrt(16.0)
    w1 = jax.random.uniform(k1, (4, 16), jnp.float32, -bound1, bound1)
    b1 = jax.random.uniform(k2, (1, 16), jnp.float32, -bound1, bound1)
    w2 = jax.random.uniform(k3, (16, 1), jnp.float32, -bound2, bound2)
    b2 = jax.random.uniform(k4, (1, 1), jnp.float32, -bound2, bound2)
    return w1, b1, w2, b2


if __name__ == "__main__":
    key = jax.random.PRNGKey(0)
    k_z, k_p = jax.random.split(key)
    B = 8
    z = jax.random.normal(k_z, (B, 4), jnp.float32)
    w1, b1, w2, b2 = init_params(k_p)

    out = latent_predictor_x5(z, w1, b1, w2, b2)
    jax.block_until_ready(out)

    # Pure-JAX reference of the forward pass (x @ W.T + b semantics).
    ref = jnp.maximum(z @ w1 + b1, 0.0) @ w2 + b2
    assert out.shape == (B, 1)
    assert jnp.allclose(out, ref, atol=1e-5, rtol=1e-5)

    print("KERNEL_OK")
</pallas_src>

<mosaic_0001>
module attributes {stable_mosaic.version = 11 : i64} {
  func.func @mlp_kernel(%arg0: i32, %arg1: memref<4x128xf32, #tpu.memory_space<vmem>>, %arg2: memref<16x4xf32, #tpu.memory_space<vmem>>, %arg3: memref<16x1xf32, #tpu.memory_space<vmem>>, %arg4: memref<16x1xf32, #tpu.memory_space<vmem>>, %arg5: memref<1x1xf32, #tpu.memory_space<smem>>, %arg6: memref<1x128xf32, #tpu.memory_space<vmem>>) attributes {dimension_semantics = [#tpu.dimension_semantics<parallel>], iteration_bounds = array<i64: 1>, scalar_prefetch = 0 : i64, scratch_operands = 0 : i64, tpu.core_type = #tpu.core_type<tc>, window_params = [{transform_indices = @transform_0, window_bounds = array<i64: 4, 128>}, {pipeline_mode = #tpu.pipeline_mode<synchronous>, transform_indices = @transform_1, window_bounds = array<i64: 16, 4>}, {pipeline_mode = #tpu.pipeline_mode<synchronous>, transform_indices = @transform_2, window_bounds = array<i64: 16, 1>}, {pipeline_mode = #tpu.pipeline_mode<synchronous>, transform_indices = @transform_3, window_bounds = array<i64: 16, 1>}, {transform_indices = @transform_4, window_bounds = array<i64: 1, 1>}, {transform_indices = @transform_5, window_bounds = array<i64: 1, 128>}]} {
    %c0 = arith.constant 0 : index
    %c0_0 = arith.constant 0 : index
    %0 = vector.load %arg1[%c0, %c0_0] : memref<4x128xf32, #tpu.memory_space<vmem>>, vector<4x128xf32>
    %c0_1 = arith.constant 0 : index
    %c0_2 = arith.constant 0 : index
    %1 = vector.load %arg2[%c0_1, %c0_2] : memref<16x4xf32, #tpu.memory_space<vmem>>, vector<16x4xf32>
    %c0_3 = arith.constant 0 : index
    %c0_4 = arith.constant 0 : index
    %2 = vector.load %arg3[%c0_3, %c0_4] : memref<16x1xf32, #tpu.memory_space<vmem>>, vector<16x1xf32>
    %3 = vector.extract_strided_slice %1 {offsets = [0, 0], sizes = [16, 1], strides = [1, 1]} : vector<16x4xf32> to vector<16x1xf32>
    %4 = vector.extract_strided_slice %0 {offsets = [0, 0], sizes = [1, 128], strides = [1, 1]} : vector<4x128xf32> to vector<1x128xf32>
    %5 = vector.broadcast %3 : vector<16x1xf32> to vector<16x128xf32>
    %6 = vector.broadcast %4 : vector<1x128xf32> to vector<16x128xf32>
    %7 = arith.mulf %5, %6 : vector<16x128xf32>
    %8 = vector.broadcast %2 : vector<16x1xf32> to vector<16x128xf32>
    %9 = arith.addf %8, %7 : vector<16x128xf32>
    %10 = vector.extract_strided_slice %1 {offsets = [0, 1], sizes = [16, 1], strides = [1, 1]} : vector<16x4xf32> to vector<16x1xf32>
    %11 = vector.extract_strided_slice %0 {offsets = [1, 0], sizes = [1, 128], strides = [1, 1]} : vector<4x128xf32> to vector<1x128xf32>
    %12 = vector.broadcast %10 : vector<16x1xf32> to vector<16x128xf32>
    %13 = vector.broadcast %11 : vector<1x128xf32> to vector<16x128xf32>
    %14 = arith.mulf %12, %13 : vector<16x128xf32>
    %15 = arith.addf %9, %14 : vector<16x128xf32>
    %16 = vector.extract_strided_slice %1 {offsets = [0, 2], sizes = [16, 1], strides = [1, 1]} : vector<16x4xf32> to vector<16x1xf32>
    %17 = vector.extract_strided_slice %0 {offsets = [2, 0], sizes = [1, 128], strides = [1, 1]} : vector<4x128xf32> to vector<1x128xf32>
    %18 = vector.broadcast %16 : vector<16x1xf32> to vector<16x128xf32>
    %19 = vector.broadcast %17 : vector<1x128xf32> to vector<16x128xf32>
    %20 = arith.mulf %18, %19 : vector<16x128xf32>
    %21 = arith.addf %15, %20 : vector<16x128xf32>
    %22 = vector.extract_strided_slice %1 {offsets = [0, 3], sizes = [16, 1], strides = [1, 1]} : vector<16x4xf32> to vector<16x1xf32>
    %23 = vector.extract_strided_slice %0 {offsets = [3, 0], sizes = [1, 128], strides = [1, 1]} : vector<4x128xf32> to vector<1x128xf32>
    %24 = vector.broadcast %22 : vector<16x1xf32> to vector<16x128xf32>
    %25 = vector.broadcast %23 : vector<1x128xf32> to vector<16x128xf32>
    %26 = arith.mulf %24, %25 : vector<16x128xf32>
    %27 = arith.addf %21, %26 : vector<16x128xf32>
    %cst = arith.constant 0.000000e+00 : f32
    %28 = vector.broadcast %cst : f32 to vector<16x128xf32>
    %29 = arith.maximumf %27, %28 : vector<16x128xf32>
    %c0_5 = arith.constant 0 : index
    %c0_6 = arith.constant 0 : index
    %30 = vector.load %arg4[%c0_5, %c0_6] : memref<16x1xf32, #tpu.memory_space<vmem>>, vector<16x1xf32>
    %31 = vector.broadcast %30 : vector<16x1xf32> to vector<16x128xf32>
    %32 = arith.mulf %29, %31 : vector<16x128xf32>
    %cst_7 = arith.constant dense<0.000000e+00> : vector<128xf32>
    %33 = vector.multi_reduction <add>, %32, %cst_7 [0] : vector<16x128xf32> to vector<128xf32>
    %34 = vector.shape_cast %33 : vector<128xf32> to vector<1x128xf32>
    %c0_8 = arith.constant 0 : index
    %c0_9 = arith.constant 0 : index
    %35 = memref.load %arg5[%c0_8, %c0_9] : memref<1x1xf32, #tpu.memory_space<smem>>
    %36 = vector.broadcast %35 : f32 to vector<1x128xf32>
    %37 = arith.addf %34, %36 : vector<1x128xf32>
    %c0_10 = arith.constant 0 : index
    %c0_11 = arith.constant 0 : index
    %38 = vector.load %arg6[%c0_10, %c0_11] : memref<1x128xf32, #tpu.memory_space<vmem>>, vector<1x128xf32>
    tpu.vector_store %arg6[%c0_10, %c0_11], %37 {strides = array<i32>} : memref<1x128xf32, #tpu.memory_space<vmem>>, vector<1x128xf32>,
    return
  }
  func.func @transform_0(%arg0: i32) -> (i32, i32) {
    %c0_i32 = arith.constant 0 : i32
    %c0_i32_0 = arith.constant 0 : i32
    return %c0_i32, %arg0 : i32, i32
  }
  func.func @transform_1(%arg0: i32) -> (i32, i32) {
    %c0_i32 = arith.constant 0 : i32
    %c0_i32_0 = arith.constant 0 : i32
    %c0_i32_1 = arith.constant 0 : i32
    return %c0_i32, %c0_i32_0 : i32, i32
  }
  func.func @transform_2(%arg0: i32) -> (i32, i32) {
    %c0_i32 = arith.constant 0 : i32
    %c0_i32_0 = arith.constant 0 : i32
    %c0_i32_1 = arith.constant 0 : i32
    return %c0_i32, %c0_i32_0 : i32, i32
  }
  func.func @transform_3(%arg0: i32) -> (i32, i32) {
    %c0_i32 = arith.constant 0 : i32
    %c0_i32_0 = arith.constant 0 : i32
    %c0_i32_1 = arith.constant 0 : i32
    return %c0_i32, %c0_i32_0 : i32, i32
  }
  func.func @transform_4(%arg0: i32) -> (i32, i32) {
    %c0_i32 = arith.constant 0 : i32
    %c0_i32_0 = arith.constant 0 : i32
    %c0_i32_1 = arith.constant 0 : i32
    return %c0_i32, %c0_i32_0 : i32, i32
  }
  func.func @transform_5(%arg0: i32) -> (i32, i32) {
    %c0_i32 = arith.constant 0 : i32
    %c0_i32_0 = arith.constant 0 : i32
    return %c0_i32, %arg0 : i32, i32
  }
}

</mosaic_0001>

<llo_original>
// kernel: latent_predictor_x5.1
$region0: #{latent_predictor_x5.1}
  #allocation0 [shape = 'u32[]', space=smem, size = 0x4, offset = 0x4, fixed_abs, tag = 'smem constant byte address 0x4 - core index']
  #allocation1 [shape = 'u32[144,128]{1,0:T(1,128)}', space=vmem, size = 0x12000, scoped, tag = 'internal scratch']
  #allocation2 [shape = 'f32[1,1]{1,0:T(1,128)S(6)}', space=smem, size = 0x200, scoped, tag = 'scoped memory for latent_predictor_x5.1']
  %s0 = inlined_call_operand.vmem [shape: f32[4,128], index: 0, kind: input, shape index: {}]
  %s1 = inlined_call_operand.vmem [shape: f32[16,4], index: 1, kind: input, shape index: {}]
  %s2 = inlined_call_operand.vmem [shape: f32[16,1], index: 2, kind: input, shape index: {}]
  %s3 = inlined_call_operand.vmem [shape: f32[16,1], index: 3, kind: input, shape index: {}]
  %s4 = inlined_call_operand.<no memory space> [shape: f32[1,1], index: 4, kind: input, shape index: {}]
  %s5 = inlined_call_operand.vmem [shape: f32[1,128], index: 5, kind: output, shape index: {}]
  %s6 = sld [smem:[#allocation0]]
  $region30: #{latent_predictor_x5.1} parent=0
    _
  %s8 = ssub.s32 1, %s6
  %s9 = scalar_select 0, %s8, %s6
  %10 = sst [smem:[#allocation2]] %s4
  // Predicated region
  $region2: #{latent_predictor_x5.1} parent=0 // pred_check
    _
  $region3: #{latent_predictor_x5.1} parent=0 // pred_check_branch
    %12 = sbr.rel (0) target = $region5
  $region4: #{latent_predictor_x5.1} parent=0 // pred_region
    _
  $region5: #{latent_predictor_x5.1} parent=0 // pred_fallthru
    _
  // Predicated region
  $region6: #{latent_predictor_x5.1} parent=0 // pred_check
    _
  $region7: #{latent_predictor_x5.1} parent=0 // pred_check_branch
    %14 = sbr.rel (0) target = $region9
  $region8: #{latent_predictor_x5.1} parent=0 // pred_region
    _
  $region9: #{latent_predictor_x5.1} parent=0 // pred_fallthru
    _
  // Predicated region
  $region10: #{latent_predictor_x5.1} parent=0 // pred_check
    _
  $region11: #{latent_predictor_x5.1} parent=0 // pred_check_branch
    %16 = sbr.rel (0) target = $region13
  $region12: #{latent_predictor_x5.1} parent=0 // pred_region
    _
  $region13: #{latent_predictor_x5.1} parent=0 // pred_fallthru
    _
  // Predicated region
  $region14: #{latent_predictor_x5.1} parent=0 // pred_check
    _
  $region15: #{latent_predictor_x5.1} parent=0 // pred_check_branch
    %18 = sbr.rel (0) target = $region17
  $region16: #{latent_predictor_x5.1} parent=0 // pred_region
    _
  $region17: #{latent_predictor_x5.1} parent=0 // pred_fallthru
    _
  // Predicated region
  $region18: #{latent_predictor_x5.1} parent=0 // pred_check
    _
  $region19: #{latent_predictor_x5.1} parent=0 // pred_check_branch
    %20 = sbr.rel (0) target = $region21
  $region20: #{latent_predictor_x5.1} parent=0 // pred_region
    _
  $region21: #{latent_predictor_x5.1} parent=0 // pred_fallthru
    _
  %v21 = vld [vmem:[%s0] sm:$0xf]
  %v22 = vld [vmem:[%s1] sm:$0xff]
  %v23 = vld [vmem:[%s1 + $0x8] sm:$0xff]
  %v24 = vld [vmem:[%s2] sm:$0xff]
  %v25 = vld [vmem:[%s2 + $0x8] sm:$0xff]
  %27 = vset.pattern.permute.xlu0 0
  %28 = vperm.xlu0 %27, %v22
  %v29 = vpop.permute.xlu0 %28
  %32 = vset.pattern.permute.xlu0 0
  %33 = vperm.xlu0 %32, %v23
  %v34 = vpop.permute.xlu0 %33
  %v36 = vlaneseq
  %v37 = vshrl.u32 %v36, 7
  %v38 = vsub.s32 0, %v37
  %v39 = vrot.slane %v21, %v38
  %v40 = vmul.f32 %v29, %v39
  %v41 = vmul.f32 %v34, %v39
  %43 = vset.pattern.permute.xlu0 0
  %44 = vperm.xlu0 %43, %v24
  %v45 = vpop.permute.xlu0 %44
  %48 = vset.pattern.permute.xlu0 0
  %49 = vperm.xlu0 %48, %v25
  %v50 = vpop.permute.xlu0 %49
  %v52 = vadd.f32 %v45, %v40
  %v53 = vadd.f32 %v50, %v41
  %54 = vset.pattern.permute.xlu0 1
  %55 = vperm.xlu0 %54, %v22
  %v56 = vpop.permute.xlu0 %55
  %58 = vset.pattern.permute.xlu0 1
  %59 = vperm.xlu0 %58, %v23
  %v60 = vpop.permute.xlu0 %59
  %v62 = vlaneseq
  %v63 = vshrl.u32 %v62, 7
  %v64 = vsub.s32 1, %v63
  %v65 = vrot.slane %v21, %v64
  %v66 = vmul.f32 %v56, %v65
  %v67 = vmul.f32 %v60, %v65
  %v68 = vadd.f32 %v52, %v66
  %v69 = vadd.f32 %v53, %v67
  %70 = vset.pattern.permute.xlu0 2
  %71 = vperm.xlu0 %70, %v22
  %v72 = vpop.permute.xlu0 %71
  %74 = vset.pattern.permute.xlu0 2
  %75 = vperm.xlu0 %74, %v23
  %v76 = vpop.permute.xlu0 %75
  %v78 = vlaneseq
  %v79 = vshrl.u32 %v78, 7
  %v80 = vsub.s32 2, %v79
  %v81 = vrot.slane %v21, %v80
  %v82 = vmul.f32 %v72, %v81
  %v83 = vmul.f32 %v76, %v81
  %v84 = vadd.f32 %v68, %v82
  %v85 = vadd.f32 %v69, %v83
  %86 = vset.pattern.permute.xlu0 3
  %87 = vperm.xlu0 %86, %v22
  %v88 = vpop.permute.xlu0 %87
  %90 = vset.pattern.permute.xlu0 3
  %91 = vperm.xlu0 %90, %v23
  %v92 = vpop.permute.xlu0 %91
  %v94 = vlaneseq
  %v95 = vshrl.u32 %v94, 7
  %v96 = vsub.s32 3, %v95
  %v97 = vrot.slane %v21, %v96
  %v98 = vmul.f32 %v88, %v97
  %v99 = vmul.f32 %v92, %v97
  %v100 = vadd.f32 %v84, %v98
  %v101 = vadd.f32 %v85, %v99
  %v102 = vmax.f32 %v100, 0.0
  %v103 = vmax.f32 %v101, 0.0
  %v104 = vld [vmem:[%s3] sm:$0xff]
  %v105 = vld [vmem:[%s3 + $0x8] sm:$0xff]
  %107 = vset.pattern.permute.xlu0 0
  %108 = vperm.xlu0 %107, %v104
  %v109 = vpop.permute.xlu0 %108
  %112 = vset.pattern.permute.xlu0 0
  %113 = vperm.xlu0 %112, %v105
  %v114 = vpop.permute.xlu0 %113
  %v116 = vmul.f32 %v102, %v109
  %v117 = vmul.f32 %v103, %v114
  %v118 = vadd.f32 %v116, %v117
  %v119 = vrot.slane %v118, 4
  %v120 = vadd.f32 %v118, %v119
  %v121 = vrot.slane %v120, 2
  %v122 = vadd.f32 %v120, %v121
  %v123 = vrot.slane %v122, 1
  %v124 = vadd.f32 %v122, %v123
  %s125 = sld [smem:[#allocation2]]
  %v126 = vstv %s125
  %v127 = vadd.f32 %v124, %v126
  %128 = vst [vmem:[%s5] sm:$0x1] %v127
  // Predicated region
  $region22: #{latent_predictor_x5.1} parent=0 // pred_check
    _
  $region23: #{latent_predictor_x5.1} parent=0 // pred_check_branch
    %130 = sbr.rel (0) target = $region25
  $region24: #{latent_predictor_x5.1} parent=0 // pred_region
    _
  $region25: #{latent_predictor_x5.1} parent=0 // pred_fallthru
    _
  // Predicated region
  $region26: #{latent_predictor_x5.1} parent=0 // pred_check
    _
  $region27: #{latent_predictor_x5.1} parent=0 // pred_check_branch
    %132 = sbr.rel (0) target = $region29
  $region28: #{latent_predictor_x5.1} parent=0 // pred_region
    _
  $region29: #{latent_predictor_x5.1} parent=0 // pred_fallthru
    _

</llo_original>
